<compile_context>
chip_gen: v6e
topology: v6e:2x2x1
jax: 0.10.0
libtpu: 0.0.40
codegen_flags: <defaults>
</compile_context>

<pallas_src>
import functools

import numpy as np
import jax
import jax.numpy as jnp
from jax.experimental import pallas as pl
from jax.experimental.pallas import tpu as pltpu


# Feature type ids (same convention as molann.feature.Feature.get_type_id()).
ANGLE, BOND, DIHEDRAL, POSITION = 0, 1, 2, 3
_LANES = 128


def _feature_dim(type_id, atom_idx, use_angle_value):
    if type_id in (ANGLE, BOND):
        return 1
    if type_id == DIHEDRAL:
        return 1 if use_angle_value else 2
    if type_id == POSITION:
        return 3 * len(atom_idx)
    raise ValueError(f"unknown feature type {type_id}")


def output_dimension(features, use_angle_value):
    return sum(_feature_dim(t, idx, use_angle_value) for t, idx in features)


# ---------------------------------------------------------------------------
# Kernel: all features for a (TS, 128) block of states at once.
# ---------------------------------------------------------------------------
def _feature_kernel(x_ref, out_ref, *, features, use_angle_value):
    # x_ref   : (3*n_used, TS, 128)  rows = (atom, xyz) atom-major
    # out_ref : (D,        TS, 128)  rows = feature components
    coord_cache = {}

    def coord(a, k):                       # lazy, memoized (TS, 128) row load
        key = (a, k)
        if key not in coord_cache:
            coord_cache[key] = x_ref[3 * a + k]
        return coord_cache[key]

    sub_cache = {}

    def sub(a, b):                         # x[a] - x[b] as a 3-tuple of (TS,128)
        key = (a, b)
        if key in sub_cache:
            return sub_cache[key]
        rkey = (b, a)
        if rkey in sub_cache:
            v = tuple(-c for c in sub_cache[rkey])
        else:
            v = tuple(coord(a, k) - coord(b, k) for k in range(3))
        sub_cache[key] = v
        return v

    def dot3(u, v):                        # unrolled VPU mul-adds, no XLU
        return u[0] * v[0] + u[1] * v[1] + u[2] * v[2]

    def cross3(u, v):
        return (u[1] * v[2] - u[2] * v[1],
                u[2] * v[0] - u[0] * v[2],
                u[0] * v[1] - u[1] * v[0])

    sq_cache = {}

    def sqdist(a, b):                      # |x[a]-x[b]|^2, shared across features
        key = (min(a, b), max(a, b))
        if key not in sq_cache:
            d = sub(a, b)
            sq_cache[key] = dot3(d, d)
        return sq_cache[key]

    norm_cache = {}

    def dist(a, b):
        key = (min(a, b), max(a, b))
        if key not in norm_cache:
            norm_cache[key] = jnp.sqrt(sqdist(a, b))
        return norm_cache[key]

    def store(row, val):                   # full unmasked (TS, 128) tile store
        out_ref[row] = val.astype(out_ref.dtype)

    off = 0
    for type_id, idx in features:          # static Python unroll
        if type_id == ANGLE:
            a0, a1, a2 = idx
            r21 = sub(a0, a1)
            r23 = sub(a2, a1)
            cos_angle = dot3(r21, r23) * jax.lax.rsqrt(sqdist(a0, a1) * sqdist(a2, a1))
            if use_angle_value:
                store(off, jnp.arccos(jnp.clip(cos_angle, -1.0, 1.0)))
            else:
                store(off, cos_angle)
            off += 1
        elif type_id == BOND:
            a0, a1 = idx
            store(off, dist(a0, a1))
            off += 1
        elif type_id == DIHEDRAL:
            a0, a1, a2, a3 = idx
            r12 = sub(a1, a0)
            r23 = sub(a2, a1)
            r34 = sub(a3, a2)
            n1 = cross3(r12, r23)
            n2 = cross3(r23, r34)
            cos_phi = dot3(n1, n2)
            sin_phi = dot3(n1, r34) * dist(a2, a1)
            if use_angle_value:
                # TODO(synk): radians path (arctan2/arccos) is implemented but not
                # exercised by the demo below; demo covers the cos/sin path.
                store(off, jnp.arctan2(sin_phi, cos_phi))
                off += 1
            else:
                inv_r = jax.lax.rsqrt(cos_phi * cos_phi + sin_phi * sin_phi)
                store(off, cos_phi * inv_r)
                store(off + 1, sin_phi * inv_r)
                off += 2
        elif type_id == POSITION:
            for a in idx:
                for k in range(3):
                    store(off, coord(a, k))
                    off += 1
        else:
            raise ValueError(f"unknown feature type {type_id}")


# ---------------------------------------------------------------------------
# Wrapper: used-atom gather + lane/sublane-dense layout + pallas_call.
# ---------------------------------------------------------------------------
def _pick_sublane_tile(n_sub, rows_in, rows_out,
                       budget_bytes=24 * 1024 * 1024, hard_cap=512):
    """Largest legal sublane tile fitting the (double-buffered) VMEM budget."""
    per_ts = 2 * (rows_in + rows_out) * _LANES * 4      # f32, in+out, 2 buffers
    ts_max = max(8, min(hard_cap, budget_bytes // max(per_ts, 1)))
    # Legal tiles: multiples of 8 that divide n_sub, or the full extent.
    cands = [t for t in range(8, n_sub + 1, 8) if n_sub % t == 0 and t <= ts_max]
    if not cands:
        return n_sub                                     # full-extent block
    multi = [t for t in cands if n_sub // t >= 2]        # keep >=2 grid steps
    return max(multi) if multi else max(cands)


def feature_layer_forward(x, features, use_angle_value=False):
    """x: (L, n_inp, 3) float32 -> (L, D) float32 (features concatenated)."""
    L, n_inp, three = x.shape
    assert three == 3
    features = tuple((int(t), tuple(int(a) for a in idx)) for t, idx in features)
    D = output_dimension(features, use_angle_value)

    # Host-side used-atom gather (static index list) + feature-index remap.
    used = sorted({a for _, idx in features for a in idx})
    remap = {a: i for i, a in enumerate(used)}
    features_local = tuple((t, tuple(remap[a] for a in idx)) for t, idx in features)
    n_used = len(used)
    rows_in = 3 * n_used

    # Pad the state axis: full (8,128) tiles for large L, 128 lanes otherwise.
    if L >= 1024:
        L_pad = -(-L // 1024) * 1024
    else:
        L_pad = -(-L // 128) * 128

    # Fused gather + lane-dense transpose (one pass over the used atoms only).
    xg = jnp.take(x, jnp.asarray(used, dtype=jnp.int32), axis=1)   # (L, n_used, 3)
    xt = jnp.transpose(xg, (1, 2, 0)).reshape(rows_in, L)          # (3*n_used, L)
    if L_pad != L:
        xt = jnp.pad(xt, ((0, 0), (0, L_pad - L)))
    n_sub = L_pad // _LANES
    x3 = xt.reshape(rows_in, n_sub, _LANES)

    TS = _pick_sublane_tile(n_sub, rows_in, D)
    grid = (n_sub // TS,)

    in_block = rows_in * TS * _LANES * 4
    out_block = D * TS * _LANES * 4
    vmem_limit = int(min(48 * 1024 * 1024,
                         max(16 * 1024 * 1024, 4 * (in_block + out_block))))

    kernel = functools.partial(_feature_kernel, features=features_local,
                               use_angle_value=use_angle_value)

    out3 = pl.pallas_call(
        kernel,
        out_shape=jax.ShapeDtypeStruct((D, n_sub, _LANES), jnp.float32),
        grid_spec=pltpu.PrefetchScalarGridSpec(
            num_scalar_prefetch=0,
            grid=grid,
            in_specs=[pl.BlockSpec((rows_in, TS, _LANES), lambda i: (0, i, 0))],
            out_specs=pl.BlockSpec((D, TS, _LANES), lambda i: (0, i, 0)),
        ),
        compiler_params=pltpu.CompilerParams(
            dimension_semantics=("parallel",),
            vmem_limit_bytes=vmem_limit,
        ),
    )(x3)

    # TODO(synk): a downstream consumer that accepts the (D, L) slab directly (or a
    # fused first Linear layer on the idle MXU) would remove this transpose pass.
    out = jnp.transpose(out3.reshape(D, L_pad), (1, 0))
    return out[:L] if L_pad != L else out


# ---------------------------------------------------------------------------
# Pure-JAX reference mirroring the PyTorch forward (sanity check).
# ---------------------------------------------------------------------------
def _feature_layer_ref(x, features, use_angle_value=False):
    outs = []
    for type_id, idx in features:
        if type_id == ANGLE:
            r21 = x[:, idx[0], :] - x[:, idx[1], :]
            r23 = x[:, idx[2], :] - x[:, idx[1], :]
            r21l = jnp.linalg.norm(r21, axis=1, keepdims=True)
            r23l = jnp.linalg.norm(r23, axis=1, keepdims=True)
            cos_angle = (r21 * r23).sum(axis=1, keepdims=True) / (r21l * r23l)
            outs.append(jnp.arccos(cos_angle) if use_angle_value else cos_angle)
        elif type_id == BOND:
            r12 = x[:, idx[1], :] - x[:, idx[0], :]
            outs.append(jnp.linalg.norm(r12, axis=1, keepdims=True))
        elif type_id == DIHEDRAL:
            r12 = x[:, idx[1], :] - x[:, idx[0], :]
            r23 = x[:, idx[2], :] - x[:, idx[1], :]
            r34 = x[:, idx[3], :] - x[:, idx[2], :]
            n1 = jnp.cross(r12, r23)
            n2 = jnp.cross(r23, r34)
            cos_phi = (n1 * n2).sum(axis=1, keepdims=True)
            sin_phi = (n1 * r34).sum(axis=1, keepdims=True) * jnp.linalg.norm(
                r23, axis=1, keepdims=True)
            radius = jnp.sqrt(cos_phi ** 2 + sin_phi ** 2)
            if use_angle_value:
                outs.append(jnp.arctan2(sin_phi, cos_phi))
            else:
                outs.append(jnp.concatenate(
                    (cos_phi / radius, sin_phi / radius), axis=1))
        elif type_id == POSITION:
            outs.append(x[:, np.array(idx), :].reshape(x.shape[0], -1))
    return jnp.concatenate(outs, axis=1)


if __name__ == "__main__":
    key = jax.random.PRNGKey(0)
    n_inp = 8   # input atom group; only atoms 0..3 are referenced by features

    # Mirrors the docstring example (0-based local indices):
    #   dihedral 'bynum 1 3 2 4', bond 'bynum 1 3', angle 'bynum 1 3 2',
    # plus one position feature over the first three atoms.
    features = (
        (DIHEDRAL, (0, 2, 1, 3)),
        (BOND, (0, 2)),
        (ANGLE, (0, 2, 1)),
        (POSITION, (0, 1, 2)),
    )
    use_angle_value = False
    # TODO(synk): constructing the feature list from MDAnalysis atom groups and
    # pandas get_feature_info() are host-side metadata, not kernel work.
    D = output_dimension(features, use_angle_value)

    # Two cases: lane/sublane-aligned L (TS=8, grid=2) and ragged L (padded).
    for L in (2048, 300):
        k = jax.random.fold_in(key, L)
        x = jax.random.normal(k, (L, n_inp, 3), dtype=jnp.float32) * 2.0 + 0.5

        out = jax.block_until_ready(
            feature_layer_forward(x, features, use_angle_value))
        ref = jax.block_until_ready(
            _feature_layer_ref(x, features, use_angle_value))

        assert out.shape == (L, D)
        assert np.allclose(np.asarray(out), np.asarray(ref),
                           atol=1e-4, rtol=1e-4), f"mismatch at L={L}"

    print("KERNEL_OK")
</pallas_src>

<mosaic_0001>
module attributes {stable_mosaic.version = 11 : i64} {
  func.func @_feature_kernel(%arg0: i32, %arg1: memref<12x8x128xf32, #tpu.memory_space<vmem>>, %arg2: memref<13x8x128xf32, #tpu.memory_space<vmem>>) attributes {dimension_semantics = [#tpu.dimension_semantics<parallel>], iteration_bounds = array<i64: 2>, scalar_prefetch = 0 : i64, scratch_operands = 0 : i64, tpu.core_type = #tpu.core_type<tc>, window_params = [{transform_indices = @transform_0, window_bounds = array<i64: 12, 8, 128>}, {transform_indices = @transform_1, window_bounds = array<i64: 13, 8, 128>}]} {
    %c6 = arith.constant 6 : index
    %c0 = arith.constant 0 : index
    %c0_0 = arith.constant 0 : index
    %0 = vector.load %arg1[%c6, %c0, %c0_0] : memref<12x8x128xf32, #tpu.memory_space<vmem>>, vector<1x8x128xf32>
    %1 = vector.shape_cast %0 : vector<1x8x128xf32> to vector<8x128xf32>
    %c0_1 = arith.constant 0 : index
    %c0_2 = arith.constant 0 : index
    %c0_3 = arith.constant 0 : index
    %2 = vector.load %arg1[%c0_1, %c0_2, %c0_3] : memref<12x8x128xf32, #tpu.memory_space<vmem>>, vector<1x8x128xf32>
    %3 = vector.shape_cast %2 : vector<1x8x128xf32> to vector<8x128xf32>
    %4 = arith.subf %1, %3 : vector<8x128xf32>
    %c7 = arith.constant 7 : index
    %c0_4 = arith.constant 0 : index
    %c0_5 = arith.constant 0 : index
    %5 = vector.load %arg1[%c7, %c0_4, %c0_5] : memref<12x8x128xf32, #tpu.memory_space<vmem>>, vector<1x8x128xf32>
    %6 = vector.shape_cast %5 : vector<1x8x128xf32> to vector<8x128xf32>
    %c1 = arith.constant 1 : index
    %c0_6 = arith.constant 0 : index
    %c0_7 = arith.constant 0 : index
    %7 = vector.load %arg1[%c1, %c0_6, %c0_7] : memref<12x8x128xf32, #tpu.memory_space<vmem>>, vector<1x8x128xf32>
    %8 = vector.shape_cast %7 : vector<1x8x128xf32> to vector<8x128xf32>
    %9 = arith.subf %6, %8 : vector<8x128xf32>
    %c8 = arith.constant 8 : index
    %c0_8 = arith.constant 0 : index
    %c0_9 = arith.constant 0 : index
    %10 = vector.load %arg1[%c8, %c0_8, %c0_9] : memref<12x8x128xf32, #tpu.memory_space<vmem>>, vector<1x8x128xf32>
    %11 = vector.shape_cast %10 : vector<1x8x128xf32> to vector<8x128xf32>
    %c2 = arith.constant 2 : index
    %c0_10 = arith.constant 0 : index
    %c0_11 = arith.constant 0 : index
    %12 = vector.load %arg1[%c2, %c0_10, %c0_11] : memref<12x8x128xf32, #tpu.memory_space<vmem>>, vector<1x8x128xf32>
    %13 = vector.shape_cast %12 : vector<1x8x128xf32> to vector<8x128xf32>
    %14 = arith.subf %11, %13 : vector<8x128xf32>
    %c3 = arith.constant 3 : index
    %c0_12 = arith.constant 0 : index
    %c0_13 = arith.constant 0 : index
    %15 = vector.load %arg1[%c3, %c0_12, %c0_13] : memref<12x8x128xf32, #tpu.memory_space<vmem>>, vector<1x8x128xf32>
    %16 = vector.shape_cast %15 : vector<1x8x128xf32> to vector<8x128xf32>
    %17 = arith.subf %16, %1 : vector<8x128xf32>
    %c4 = arith.constant 4 : index
    %c0_14 = arith.constant 0 : index
    %c0_15 = arith.constant 0 : index
    %18 = vector.load %arg1[%c4, %c0_14, %c0_15] : memref<12x8x128xf32, #tpu.memory_space<vmem>>, vector<1x8x128xf32>
    %19 = vector.shape_cast %18 : vector<1x8x128xf32> to vector<8x128xf32>
    %20 = arith.subf %19, %6 : vector<8x128xf32>
    %c5 = arith.constant 5 : index
    %c0_16 = arith.constant 0 : index
    %c0_17 = arith.constant 0 : index
    %21 = vector.load %arg1[%c5, %c0_16, %c0_17] : memref<12x8x128xf32, #tpu.memory_space<vmem>>, vector<1x8x128xf32>
    %22 = vector.shape_cast %21 : vector<1x8x128xf32> to vector<8x128xf32>
    %23 = arith.subf %22, %11 : vector<8x128xf32>
    %c9 = arith.constant 9 : index
    %c0_18 = arith.constant 0 : index
    %c0_19 = arith.constant 0 : index
    %24 = vector.load %arg1[%c9, %c0_18, %c0_19] : memref<12x8x128xf32, #tpu.memory_space<vmem>>, vector<1x8x128xf32>
    %25 = vector.shape_cast %24 : vector<1x8x128xf32> to vector<8x128xf32>
    %26 = arith.subf %25, %16 : vector<8x128xf32>
    %c10 = arith.constant 10 : index
    %c0_20 = arith.constant 0 : index
    %c0_21 = arith.constant 0 : index
    %27 = vector.load %arg1[%c10, %c0_20, %c0_21] : memref<12x8x128xf32, #tpu.memory_space<vmem>>, vector<1x8x128xf32>
    %28 = vector.shape_cast %27 : vector<1x8x128xf32> to vector<8x128xf32>
    %29 = arith.subf %28, %19 : vector<8x128xf32>
    %c11 = arith.constant 11 : index
    %c0_22 = arith.constant 0 : index
    %c0_23 = arith.constant 0 : index
    %30 = vector.load %arg1[%c11, %c0_22, %c0_23] : memref<12x8x128xf32, #tpu.memory_space<vmem>>, vector<1x8x128xf32>
    %31 = vector.shape_cast %30 : vector<1x8x128xf32> to vector<8x128xf32>
    %32 = arith.subf %31, %22 : vector<8x128xf32>
    %33 = arith.mulf %9, %23 : vector<8x128xf32>
    %34 = arith.mulf %14, %20 : vector<8x128xf32>
    %35 = arith.subf %33, %34 : vector<8x128xf32>
    %36 = arith.mulf %14, %17 : vector<8x128xf32>
    %37 = arith.mulf %4, %23 : vector<8x128xf32>
    %38 = arith.subf %36, %37 : vector<8x128xf32>
    %39 = arith.mulf %4, %20 : vector<8x128xf32>
    %40 = arith.mulf %9, %17 : vector<8x128xf32>
    %41 = arith.subf %39, %40 : vector<8x128xf32>
    %42 = arith.mulf %20, %32 : vector<8x128xf32>
    %43 = arith.mulf %23, %29 : vector<8x128xf32>
    %44 = arith.subf %42, %43 : vector<8x128xf32>
    %45 = arith.mulf %23, %26 : vector<8x128xf32>
    %46 = arith.mulf %17, %32 : vector<8x128xf32>
    %47 = arith.subf %45, %46 : vector<8x128xf32>
    %48 = arith.mulf %17, %29 : vector<8x128xf32>
    %49 = arith.mulf %20, %26 : vector<8x128xf32>
    %50 = arith.subf %48, %49 : vector<8x128xf32>
    %51 = arith.mulf %35, %44 : vector<8x128xf32>
    %52 = arith.mulf %38, %47 : vector<8x128xf32>
    %53 = arith.addf %51, %52 : vector<8x128xf32>
    %54 = arith.mulf %41, %50 : vector<8x128xf32>
    %55 = arith.addf %53, %54 : vector<8x128xf32>
    %56 = arith.mulf %35, %26 : vector<8x128xf32>
    %57 = arith.mulf %38, %29 : vector<8x128xf32>
    %58 = arith.addf %56, %57 : vector<8x128xf32>
    %59 = arith.mulf %41, %32 : vector<8x128xf32>
    %60 = arith.addf %58, %59 : vector<8x128xf32>
    %61 = arith.mulf %17, %17 : vector<8x128xf32>
    %62 = arith.mulf %20, %20 : vector<8x128xf32>
    %63 = arith.addf %61, %62 : vector<8x128xf32>
    %64 = arith.mulf %23, %23 : vector<8x128xf32>
    %65 = arith.addf %63, %64 : vector<8x128xf32>
    %66 = math.sqrt %65 : vector<8x128xf32>
    %67 = arith.mulf %60, %66 : vector<8x128xf32>
    %68 = arith.mulf %55, %55 : vector<8x128xf32>
    %69 = arith.mulf %67, %67 : vector<8x128xf32>
    %70 = arith.addf %68, %69 : vector<8x128xf32>
    %71 = math.rsqrt %70 : vector<8x128xf32>
    %72 = arith.mulf %55, %71 : vector<8x128xf32>
    %c0_24 = arith.constant 0 : index
    %c0_25 = arith.constant 0 : index
    %c0_26 = arith.constant 0 : index
    %73 = vector.load %arg2[%c0_24, %c0_25, %c0_26] : memref<13x8x128xf32, #tpu.memory_space<vmem>>, vector<1x8x128xf32>
    %74 = vector.shape_cast %73 : vector<1x8x128xf32> to vector<8x128xf32>
    %75 = vector.shape_cast %72 : vector<8x128xf32> to vector<1x8x128xf32>
    tpu.vector_store %arg2[%c0_24, %c0_25, %c0_26], %75 {strides = array<i32>} : memref<13x8x128xf32, #tpu.memory_space<vmem>>, vector<1x8x128xf32>,
    %76 = arith.mulf %67, %71 : vector<8x128xf32>
    %c1_27 = arith.constant 1 : index
    %c0_28 = arith.constant 0 : index
    %c0_29 = arith.constant 0 : index
    %77 = vector.load %arg2[%c1_27, %c0_28, %c0_29] : memref<13x8x128xf32, #tpu.memory_space<vmem>>, vector<1x8x128xf32>
    %78 = vector.shape_cast %77 : vector<1x8x128xf32> to vector<8x128xf32>
    %79 = vector.shape_cast %76 : vector<8x128xf32> to vector<1x8x128xf32>
    tpu.vector_store %arg2[%c1_27, %c0_28, %c0_29], %79 {strides = array<i32>} : memref<13x8x128xf32, #tpu.memory_space<vmem>>, vector<1x8x128xf32>,
    %cst = arith.constant 0.000000e+00 : f32
    %80 = vector.broadcast %cst : f32 to vector<8x128xf32>
    %81 = arith.subf %80, %4 : vector<8x128xf32>
    %cst_30 = arith.constant 0.000000e+00 : f32
    %82 = vector.broadcast %cst_30 : f32 to vector<8x128xf32>
    %83 = arith.subf %82, %9 : vector<8x128xf32>
    %cst_31 = arith.constant 0.000000e+00 : f32
    %84 = vector.broadcast %cst_31 : f32 to vector<8x128xf32>
    %85 = arith.subf %84, %14 : vector<8x128xf32>
    %86 = arith.mulf %81, %81 : vector<8x128xf32>
    %87 = arith.mulf %83, %83 : vector<8x128xf32>
    %88 = arith.addf %86, %87 : vector<8x128xf32>
    %89 = arith.mulf %85, %85 : vector<8x128xf32>
    %90 = arith.addf %88, %89 : vector<8x128xf32>
    %91 = math.sqrt %90 : vector<8x128xf32>
    %c2_32 = arith.constant 2 : index
    %c0_33 = arith.constant 0 : index
    %c0_34 = arith.constant 0 : index
    %92 = vector.load %arg2[%c2_32, %c0_33, %c0_34] : memref<13x8x128xf32, #tpu.memory_space<vmem>>, vector<1x8x128xf32>
    %93 = vector.shape_cast %92 : vector<1x8x128xf32> to vector<8x128xf32>
    %94 = vector.shape_cast %91 : vector<8x128xf32> to vector<1x8x128xf32>
    tpu.vector_store %arg2[%c2_32, %c0_33, %c0_34], %94 {strides = array<i32>} : memref<13x8x128xf32, #tpu.memory_space<vmem>>, vector<1x8x128xf32>,
    %95 = arith.mulf %81, %17 : vector<8x128xf32>
    %96 = arith.mulf %83, %20 : vector<8x128xf32>
    %97 = arith.addf %95, %96 : vector<8x128xf32>
    %98 = arith.mulf %85, %23 : vector<8x128xf32>
    %99 = arith.addf %97, %98 : vector<8x128xf32>
    %100 = arith.mulf %90, %65 : vector<8x128xf32>
    %101 = math.rsqrt %100 : vector<8x128xf32>
    %102 = arith.mulf %99, %101 : vector<8x128xf32>
    %c3_35 = arith.constant 3 : index
    %c0_36 = arith.constant 0 : index
    %c0_37 = arith.constant 0 : index
    %103 = vector.load %arg2[%c3_35, %c0_36, %c0_37] : memref<13x8x128xf32, #tpu.memory_space<vmem>>, vector<1x8x128xf32>
    %104 = vector.shape_cast %103 : vector<1x8x128xf32> to vector<8x128xf32>
    %105 = vector.shape_cast %102 : vector<8x128xf32> to vector<1x8x128xf32>
    tpu.vector_store %arg2[%c3_35, %c0_36, %c0_37], %105 {strides = array<i32>} : memref<13x8x128xf32, #tpu.memory_space<vmem>>, vector<1x8x128xf32>,
    %c4_38 = arith.constant 4 : index
    %c0_39 = arith.constant 0 : index
    %c0_40 = arith.constant 0 : index
    %106 = vector.load %arg2[%c4_38, %c0_39, %c0_40] : memref<13x8x128xf32, #tpu.memory_space<vmem>>, vector<1x8x128xf32>
    %107 = vector.shape_cast %106 : vector<1x8x128xf32> to vector<8x128xf32>
    %108 = vector.shape_cast %3 : vector<8x128xf32> to vector<1x8x128xf32>
    tpu.vector_store %arg2[%c4_38, %c0_39, %c0_40], %108 {strides = array<i32>} : memref<13x8x128xf32, #tpu.memory_space<vmem>>, vector<1x8x128xf32>,
    %c5_41 = arith.constant 5 : index
    %c0_42 = arith.constant 0 : index
    %c0_43 = arith.constant 0 : index
    %109 = vector.load %arg2[%c5_41, %c0_42, %c0_43] : memref<13x8x128xf32, #tpu.memory_space<vmem>>, vector<1x8x128xf32>
    %110 = vector.shape_cast %109 : vector<1x8x128xf32> to vector<8x128xf32>
    %111 = vector.shape_cast %8 : vector<8x128xf32> to vector<1x8x128xf32>
    tpu.vector_store %arg2[%c5_41, %c0_42, %c0_43], %111 {strides = array<i32>} : memref<13x8x128xf32, #tpu.memory_space<vmem>>, vector<1x8x128xf32>,
    %c6_44 = arith.constant 6 : index
    %c0_45 = arith.constant 0 : index
    %c0_46 = arith.constant 0 : index
    %112 = vector.load %arg2[%c6_44, %c0_45, %c0_46] : memref<13x8x128xf32, #tpu.memory_space<vmem>>, vector<1x8x128xf32>
    %113 = vector.shape_cast %112 : vector<1x8x128xf32> to vector<8x128xf32>
    %114 = vector.shape_cast %13 : vector<8x128xf32> to vector<1x8x128xf32>
    tpu.vector_store %arg2[%c6_44, %c0_45, %c0_46], %114 {strides = array<i32>} : memref<13x8x128xf32, #tpu.memory_space<vmem>>, vector<1x8x128xf32>,
    %c7_47 = arith.constant 7 : index
    %c0_48 = arith.constant 0 : index
    %c0_49 = arith.constant 0 : index
    %115 = vector.load %arg2[%c7_47, %c0_48, %c0_49] : memref<13x8x128xf32, #tpu.memory_space<vmem>>, vector<1x8x128xf32>
    %116 = vector.shape_cast %115 : vector<1x8x128xf32> to vector<8x128xf32>
    %117 = vector.shape_cast %16 : vector<8x128xf32> to vector<1x8x128xf32>
    tpu.vector_store %arg2[%c7_47, %c0_48, %c0_49], %117 {strides = array<i32>} : memref<13x8x128xf32, #tpu.memory_space<vmem>>, vector<1x8x128xf32>,
    %c8_50 = arith.constant 8 : index
    %c0_51 = arith.constant 0 : index
    %c0_52 = arith.constant 0 : index
    %118 = vector.load %arg2[%c8_50, %c0_51, %c0_52] : memref<13x8x128xf32, #tpu.memory_space<vmem>>, vector<1x8x128xf32>
    %119 = vector.shape_cast %118 : vector<1x8x128xf32> to vector<8x128xf32>
    %120 = vector.shape_cast %19 : vector<8x128xf32> to vector<1x8x128xf32>
    tpu.vector_store %arg2[%c8_50, %c0_51, %c0_52], %120 {strides = array<i32>} : memref<13x8x128xf32, #tpu.memory_space<vmem>>, vector<1x8x128xf32>,
    %c9_53 = arith.constant 9 : index
    %c0_54 = arith.constant 0 : index
    %c0_55 = arith.constant 0 : index
    %121 = vector.load %arg2[%c9_53, %c0_54, %c0_55] : memref<13x8x128xf32, #tpu.memory_space<vmem>>, vector<1x8x128xf32>
    %122 = vector.shape_cast %121 : vector<1x8x128xf32> to vector<8x128xf32>
    %123 = vector.shape_cast %22 : vector<8x128xf32> to vector<1x8x128xf32>
    tpu.vector_store %arg2[%c9_53, %c0_54, %c0_55], %123 {strides = array<i32>} : memref<13x8x128xf32, #tpu.memory_space<vmem>>, vector<1x8x128xf32>,
    %c10_56 = arith.constant 10 : index
    %c0_57 = arith.constant 0 : index
    %c0_58 = arith.constant 0 : index
    %124 = vector.load %arg2[%c10_56, %c0_57, %c0_58] : memref<13x8x128xf32, #tpu.memory_space<vmem>>, vector<1x8x128xf32>
    %125 = vector.shape_cast %124 : vector<1x8x128xf32> to vector<8x128xf32>
    %126 = vector.shape_cast %1 : vector<8x128xf32> to vector<1x8x128xf32>
    tpu.vector_store %arg2[%c10_56, %c0_57, %c0_58], %126 {strides = array<i32>} : memref<13x8x128xf32, #tpu.memory_space<vmem>>, vector<1x8x128xf32>,
    %c11_59 = arith.constant 11 : index
    %c0_60 = arith.constant 0 : index
    %c0_61 = arith.constant 0 : index
    %127 = vector.load %arg2[%c11_59, %c0_60, %c0_61] : memref<13x8x128xf32, #tpu.memory_space<vmem>>, vector<1x8x128xf32>
    %128 = vector.shape_cast %127 : vector<1x8x128xf32> to vector<8x128xf32>
    %129 = vector.shape_cast %6 : vector<8x128xf32> to vector<1x8x128xf32>
    tpu.vector_store %arg2[%c11_59, %c0_60, %c0_61], %129 {strides = array<i32>} : memref<13x8x128xf32, #tpu.memory_space<vmem>>, vector<1x8x128xf32>,
    %c12 = arith.constant 12 : index
    %c0_62 = arith.constant 0 : index
    %c0_63 = arith.constant 0 : index
    %130 = vector.load %arg2[%c12, %c0_62, %c0_63] : memref<13x8x128xf32, #tpu.memory_space<vmem>>, vector<1x8x128xf32>
    %131 = vector.shape_cast %130 : vector<1x8x128xf32> to vector<8x128xf32>
    %132 = vector.shape_cast %11 : vector<8x128xf32> to vector<1x8x128xf32>
    tpu.vector_store %arg2[%c12, %c0_62, %c0_63], %132 {strides = array<i32>} : memref<13x8x128xf32, #tpu.memory_space<vmem>>, vector<1x8x128xf32>,
    return
  }
  func.func @transform_0(%arg0: i32) -> (i32, i32, i32) {
    %c0_i32 = arith.constant 0 : i32
    %c0_i32_0 = arith.constant 0 : i32
    %c0_i32_1 = arith.constant 0 : i32
    return %c0_i32, %arg0, %c0_i32_0 : i32, i32, i32
  }
  func.func @transform_1(%arg0: i32) -> (i32, i32, i32) {
    %c0_i32 = arith.constant 0 : i32
    %c0_i32_0 = arith.constant 0 : i32
    %c0_i32_1 = arith.constant 0 : i32
    return %c0_i32, %arg0, %c0_i32_0 : i32, i32, i32
  }
}

</mosaic_0001>

<llo_original>
// kernel: tpu_custom_call.1
$region0: #{tpu_custom_call.1}
  #allocation0 [shape = 'u32[]', space=smem, size = 0x4, offset = 0x4, fixed_abs, tag = 'smem constant byte address 0x4 - core index']
  #allocation1 [shape = 'u32[144,128]{1,0:T(1,128)}', space=vmem, size = 0x12000, scoped, tag = 'internal scratch']
  %s0 = inlined_call_operand.hbm [shape: f32[12,16,128], index: 0, kind: input, shape index: {}]
  %s1 = inlined_call_operand.hbm [shape: f32[13,16,128], index: 1, kind: output, shape index: {}]
  %s2 = sld [smem:[#allocation0]]
  $region41: #{tpu_custom_call.1} parent=0
    _
  %s4 = ssub.s32 1, %s2
  %s5 = scalar_select 0, %s4, %s2
  $region1: #{tpu_custom_call.1} parent=0
    #allocation2 [shape = 'u8[98304]{0}', space=vmem, size = 0x18000, scoped, tag = 'input window, operand 0']
    #allocation3 [shape = 's32[2]{0}', space=sflag, size = 0x8, scoped, tag = 'scoped memory for tpu_custom_call.1']
    #allocation4 [shape = 's32[2]{0}', space=sflag, size = 0x8, scoped, tag = 'scoped memory for tpu_custom_call.1']
    #allocation5 [shape = 'u8[106496]{0}', space=vmem, size = 0x1a000, scoped, tag = 'output window, operand 0']
    %6 = vsyncpa [#allocation3], 0
    %s7 = scalar_lea.sflag [#allocation3], 1
    %8 = vsyncpa %s7, 0
    %9 = vsyncpa [#allocation4], 0
    %s10 = scalar_lea.sflag [#allocation4], 1
    %11 = vsyncpa %s10, 0
    loop: start=0, step=1, limit=4
    $region2: #{tpu_custom_call.1} parent=1 // loop_pre_header
      _
    $region3: #{tpu_custom_call.1} parent=1 // loop_header
      %s13 = sphi 0, %s17
      %p14 = scmp.ge.s32.totalorder %s13, 4
      %s23 = sphi 0, %s25
      %s26 = sphi 0, %s23
      %s27 = sphi 0, %s26
      %s43 = sphi 0, %s27
      %s49 = sphi 0, %s51
      %s52 = sphi 0, %s49
      %s53 = sphi 0, %s52
      %s69 = sphi 0, %s53
    $region4: #{tpu_custom_call.1} parent=1 // loop_header_branch
      %16 = sbr.rel (%p14) target = $region8
    $region5: #{tpu_custom_call.1} parent=1 // loop_body
      %s18 = ssub.s32 %s13, 1
      %s19 = ssub.s32 %s13, 2
      %s20 = sadd.s32 %s13, 1
      %s21 = ssub.s32 %s13, %s20
      %p22 = scmp.eq.s32.totalorder %s21, 0
      %s24 = sadd.s32 %s23, 1
      %s25 = scalar_select %p22, %s23, %s24
      %p28 = pneg %p22
      %p29 = scmp.eq.s32.totalorder %s13, 1
      %p30 = por %p28, %p29
      %p31 = scmp.ne.s32.totalorder %s23, %s26
      %p32 = scmp.eq.s32.totalorder %s13, 0
      %p33 = por %p31, %p32
      %p34 = scmp.ne.s32.totalorder %s23, %s26
      %p35 = scmp.eq.s32.totalorder %s18, 1
      %p36 = por %p34, %p35
      %p37 = scmp.ne.s32.totalorder %s26, %s27
      %p38 = scmp.eq.s32.totalorder %s18, 0
      %p39 = por %p37, %p38
      %p40 = scmp.ne.s32.totalorder %s26, %s27
      %p41 = scmp.eq.s32.totalorder %s19, 1
      %p42 = por %p40, %p41
      %p44 = scmp.ne.s32.totalorder %s27, %s43
      %p45 = scmp.eq.s32.totalorder %s19, 0
      %p46 = por %p44, %p45
      %s47 = ssub.s32 %s13, %s20
      %p48 = scmp.eq.s32.totalorder %s47, 0
      %s50 = sadd.s32 %s49, 1
      %s51 = scalar_select %p48, %s49, %s50
      %p54 = pneg %p48
      %p55 = scmp.eq.s32.totalorder %s13, 1
      %p56 = por %p54, %p55
      %p57 = scmp.ne.s32.totalorder %s49, %s52
      %p58 = scmp.eq.s32.totalorder %s13, 0
      %p59 = por %p57, %p58
      %p60 = scmp.ne.s32.totalorder %s49, %s52
      %p61 = scmp.eq.s32.totalorder %s18, 1
      %p62 = por %p60, %p61
      %p63 = scmp.ne.s32.totalorder %s52, %s53
      %p64 = scmp.eq.s32.totalorder %s18, 0
      %p65 = por %p63, %p64
      %p66 = scmp.ne.s32.totalorder %s52, %s53
      %p67 = scmp.eq.s32.totalorder %s19, 1
      %p68 = por %p66, %p67
      %p70 = scmp.ne.s32.totalorder %s53, %s69
      %p71 = scmp.eq.s32.totalorder %s19, 0
      %p72 = por %p70, %p71
      %p73 = scmp.le.s32.totalorder 1, %s13
      %p74 = scmp.lt.s32.totalorder %s13, 3
      %p75 = pnand %p73, %p74
      %p76 = pneg %p75
      // Predicated region
      $region9: #{tpu_custom_call.1} parent=5 // pred_check
        _
      $region10: #{tpu_custom_call.1} parent=5 // pred_check_branch
        %78 = sbr.rel (%p75) target = $region12
      $region11: #{tpu_custom_call.1} parent=5 // pred_region
        %s79 = ssub.s32 %s13, 1
      $region12: #{tpu_custom_call.1} parent=5 // pred_fallthru
        _
      %p80 = scmp.lt.s32.totalorder %s13, 2
      // Predicated region
      $region13: #{tpu_custom_call.1} parent=5 // pred_check
        %p81 = pneg %p80
      $region14: #{tpu_custom_call.1} parent=5 // pred_check_branch
        %83 = sbr.rel (%p81) target = $region16
      $region15: #{tpu_custom_call.1} parent=5 // pred_region
        // Predicated region
        $region17: #{tpu_custom_call.1} parent=15 // pred_check
          %p84 = pneg %p33
        $region18: #{tpu_custom_call.1} parent=15 // pred_check_branch
          %86 = sbr.rel (%p84) target = $region20
        $region19: #{tpu_custom_call.1} parent=15 // pred_region
          %s87 = sand.u32 %s23, 1
          %s88 = scalar_lea.sflag [#allocation3], %s87
          %s89 = sand.u32 %s23, 1
          %s90 = smul.addr %s89, 96
          %s91 = scalar_lea.vmem [#allocation2], %s90
          %s93 = ssub.s32 1536, 1536
          %94 = vsyncadd %s88, %s93
          %s95 = smul.addr %s13, 128
          %s96 = scalar_lea.hbm %s0, %s95
          %s97 = sshll.u32 %s91, 4
          %s98 = int_to_ptr.vmem [resolvable:$true] %s97
          %103 = dma.hbm_to_vmem [thread:$0]  %s96, 1536, %s98, %s88, 256, 128, 8
        $region20: #{tpu_custom_call.1} parent=15 // pred_fallthru
          _
      $region16: #{tpu_custom_call.1} parent=5 // pred_fallthru
        _
      %p104 = scmp.le.s32.totalorder 1, %s13
      %p105 = scmp.lt.s32.totalorder %s13, 3
      %p106 = pnand %p104, %p105
      %p107 = pneg %p106
      // Predicated region
      $region21: #{tpu_custom_call.1} parent=5 // pred_check
        _
      $region22: #{tpu_custom_call.1} parent=5 // pred_check_branch
        %109 = sbr.rel (%p106) target = $region24
      $region23: #{tpu_custom_call.1} parent=5 // pred_region
        %s110 = ssub.s32 %s13, 1
        %s111 = sand.u32 %s26, 1
        %s112 = scalar_lea.sflag [#allocation3], %s111
        %s113 = sand.u32 %s26, 1
        %s114 = smul.addr %s113, 96
        %s115 = scalar_lea.vmem [#allocation2], %s114
        // Predicated region
        $region25: #{tpu_custom_call.1} parent=23 // pred_check
          %p116 = pneg %p39
        $region26: #{tpu_custom_call.1} parent=23 // pred_check_branch
          %118 = sbr.rel (%p116) target = $region28
        $region27: #{tpu_custom_call.1} parent=23 // pred_region
          %119 = dma.done %s112, 1536
        $region28: #{tpu_custom_call.1} parent=23 // pred_fallthru
          _
        %s120 = sand.u32 %s26, 1
        %s121 = scalar_lea.sflag [#allocation3], %s120
        %s122 = sand.u32 %s26, 1
        %s123 = smul.addr %s122, 96
        %s124 = scalar_lea.vmem [#allocation2], %s123
        %p125 = pneg %p39
        %p126 = pneg %p36
        %p127 = pneg %p65
        %p128 = pneg %p62
        %s129 = sand.u32 %s52, 1
        %s130 = scalar_lea.sflag [#allocation4], %s129
        %s131 = sand.u32 %s52, 1
        %s132 = smul.addr %s131, 104
        %s133 = scalar_lea.vmem [#allocation5], %s132
        %s134 = scalar_lea.vmem %s115, 48 [#allocation2]
        %v135 = vld [vmem:[%s134] sm:$0xff]
        %v136 = vld [vmem:[%s115] sm:$0xff]
        %v137 = vsub.f32 %v135, %v136
        %s138 = scalar_lea.vmem %s115, 56 [#allocation2]
        %v139 = vld [vmem:[%s138] sm:$0xff]
        %s140 = scalar_lea.vmem %s115, 8 [#allocation2]
        %v141 = vld [vmem:[%s140] sm:$0xff]
        %v142 = vsub.f32 %v139, %v141
        %s143 = scalar_lea.vmem %s115, 64 [#allocation2]
        %v144 = vld [vmem:[%s143] sm:$0xff]
        %s145 = scalar_lea.vmem %s115, 16 [#allocation2]
        %v146 = vld [vmem:[%s145] sm:$0xff]
        %v147 = vsub.f32 %v144, %v146
        %s148 = scalar_lea.vmem %s115, 24 [#allocation2]
        %v149 = vld [vmem:[%s148] sm:$0xff]
        %v150 = vsub.f32 %v149, %v135
        %s151 = scalar_lea.vmem %s115, 32 [#allocation2]
        %v152 = vld [vmem:[%s151] sm:$0xff]
        %v153 = vsub.f32 %v152, %v139
        %s154 = scalar_lea.vmem %s115, 40 [#allocation2]
        %v155 = vld [vmem:[%s154] sm:$0xff]
        %v156 = vsub.f32 %v155, %v144
        %s157 = scalar_lea.vmem %s115, 72 [#allocation2]
        %v158 = vld [vmem:[%s157] sm:$0xff]
        %v159 = vsub.f32 %v158, %v149
        %s160 = scalar_lea.vmem %s115, 80 [#allocation2]
        %v161 = vld [vmem:[%s160] sm:$0xff]
        %v162 = vsub.f32 %v161, %v152
        %s163 = scalar_lea.vmem %s115, 88 [#allocation2]
        %v164 = vld [vmem:[%s163] sm:$0xff]
        %v165 = vsub.f32 %v164, %v155
        %v166 = vmul.f32 %v142, %v156
        %v167 = vmul.f32 %v147, %v153
        %v168 = vsub.f32 %v166, %v167
        %v169 = vmul.f32 %v147, %v150
        %v170 = vmul.f32 %v137, %v156
        %v171 = vsub.f32 %v169, %v170
        %v172 = vmul.f32 %v137, %v153
        %v173 = vmul.f32 %v142, %v150
        %v174 = vsub.f32 %v172, %v173
        %v175 = vmul.f32 %v153, %v165
        %v176 = vmul.f32 %v156, %v162
        %v177 = vsub.f32 %v175, %v176
        %v178 = vmul.f32 %v156, %v159
        %v179 = vmul.f32 %v150, %v165
        %v180 = vsub.f32 %v178, %v179
        %v181 = vmul.f32 %v150, %v162
        %v182 = vmul.f32 %v153, %v159
        %v183 = vsub.f32 %v181, %v182
        %v184 = vmul.f32 %v168, %v177
        %v185 = vmul.f32 %v171, %v180
        %v186 = vadd.f32 %v184, %v185
        %v187 = vmul.f32 %v174, %v183
        %v188 = vadd.f32 %v186, %v187
        %v189 = vmul.f32 %v168, %v159
        %v190 = vmul.f32 %v171, %v162
        %v191 = vadd.f32 %v189, %v190
        %v192 = vmul.f32 %v174, %v165
        %v193 = vadd.f32 %v191, %v192
        %v194 = vmul.f32 %v150, %v150
        %v195 = vmul.f32 %v153, %v153
        %v196 = vadd.f32 %v194, %v195
        %v197 = vmul.f32 %v156, %v156
        %v198 = vadd.f32 %v196, %v197
        %v199 = vrsqrt.pop %v198
        %v200 = vmul.f32 %v198, %v199
        %vm201 = vcmp.eq.f32.partialorder %v198, inf
        %v202 = vsel %vm201, %v198, %v200
        %vm203 = vcmp.eq.f32.partialorder %v198, 0.0
        %v204 = vand.u32 %v198, 2147483648
        %v205 = vsel %vm203, %v204, %v202
        %v206 = vmul.f32 %v193, %v205
        %v207 = vmul.f32 %v188, %v188
        %v208 = vmul.f32 %v206, %v206
        %v209 = vadd.f32 %v207, %v208
        %v210 = vrsqrt.pop %v209
        %v211 = vmul.f32 %v188, %v210
        %212 = vst [vmem:[%s133] sm:$0xff] %v211
        %v213 = vmul.f32 %v206, %v210
        %s214 = scalar_lea.vmem %s133, 8 [#allocation5]
        %215 = vst [vmem:[%s214] sm:$0xff] %v213
        %v216 = vsub.f32 0.0, %v137
        %v217 = vsub.f32 0.0, %v142
        %v218 = vsub.f32 0.0, %v147
        %v219 = vmul.f32 %v216, %v216
        %v220 = vmul.f32 %v217, %v217
        %v221 = vadd.f32 %v219, %v220
        %v222 = vmul.f32 %v218, %v218
        %v223 = vadd.f32 %v221, %v222
        %v224 = vrsqrt.pop %v223
        %v225 = vmul.f32 %v223, %v224
        %vm226 = vcmp.eq.f32.partialorder %v223, inf
        %v227 = vsel %vm226, %v223, %v225
        %vm228 = vcmp.eq.f32.partialorder %v223, 0.0
        %v229 = vand.u32 %v223, 2147483648
        %v230 = vsel %vm228, %v229, %v227
        %s231 = scalar_lea.vmem %s133, 16 [#allocation5]
        %232 = vst [vmem:[%s231] sm:$0xff] %v230
        %v233 = vmul.f32 %v216, %v150
        %v234 = vmul.f32 %v217, %v153
        %v235 = vadd.f32 %v233, %v234
        %v236 = vmul.f32 %v218, %v156
        %v237 = vadd.f32 %v235, %v236
        %v238 = vmul.f32 %v223, %v198
        %v239 = vrsqrt.pop %v238
        %v240 = vmul.f32 %v237, %v239
        %s241 = scalar_lea.vmem %s133, 24 [#allocation5]
        %242 = vst [vmem:[%s241] sm:$0xff] %v240
        %s243 = scalar_lea.vmem %s133, 32 [#allocation5]
        %244 = vst [vmem:[%s243] sm:$0xff] %v136
        %s245 = scalar_lea.vmem %s133, 40 [#allocation5]
        %246 = vst [vmem:[%s245] sm:$0xff] %v141
        %s247 = scalar_lea.vmem %s133, 48 [#allocation5]
        %248 = vst [vmem:[%s247] sm:$0xff] %v146
        %s249 = scalar_lea.vmem %s133, 56 [#allocation5]
        %250 = vst [vmem:[%s249] sm:$0xff] %v149
        %s251 = scalar_lea.vmem %s133, 64 [#allocation5]
        %252 = vst [vmem:[%s251] sm:$0xff] %v152
        %s253 = scalar_lea.vmem %s133, 72 [#allocation5]
        %254 = vst [vmem:[%s253] sm:$0xff] %v155
        %s255 = scalar_lea.vmem %s133, 80 [#allocation5]
        %256 = vst [vmem:[%s255] sm:$0xff] %v135
        %s257 = scalar_lea.vmem %s133, 88 [#allocation5]
        %258 = vst [vmem:[%s257] sm:$0xff] %v139
        %s259 = scalar_lea.vmem %s133, 96 [#allocation5]
        %260 = vst [vmem:[%s259] sm:$0xff] %v144
        %s261 = sand.u32 %s52, 1
        %s262 = scalar_lea.sflag [#allocation4], %s261
        %s263 = sand.u32 %s52, 1
        %s264 = smul.addr %s263, 104
        %s265 = scalar_lea.vmem [#allocation5], %s264
        // Predicated region
        $region29: #{tpu_custom_call.1} parent=23 // pred_check
          %p266 = pneg %p62
        $region30: #{tpu_custom_call.1} parent=23 // pred_check_branch
          %268 = sbr.rel (%p266) target = $region32
        $region31: #{tpu_custom_call.1} parent=23 // pred_region
          %s270 = ssub.s32 1664, 1664
          %271 = vsyncadd %s262, %s270
          %s272 = smul.addr %s18, 128
          %s273 = scalar_lea.hbm %s1, %s272
          %s274 = sshll.u32 %s265, 4
          %s275 = int_to_ptr.vmem [resolvable:$true] %s274
          %280 = dma.vmem_to_hbm [thread:$0]  %s275, 1664, %s273, %s262, 128, 256, 8
        $region32: #{tpu_custom_call.1} parent=23 // pred_fallthru
          _
      $region24: #{tpu_custom_call.1} parent=5 // pred_fallthru
        _
      %p281 = scmp.le.s32.totalorder 2, %s13
      // Predicated region
      $region33: #{tpu_custom_call.1} parent=5 // pred_check
        %p282 = pneg %p281
      $region34: #{tpu_custom_call.1} parent=5 // pred_check_branch
        %284 = sbr.rel (%p282) target = $region36
      $region35: #{tpu_custom_call.1} parent=5 // pred_region
        %s285 = ssub.s32 %s13, 2
        // Predicated region
        $region37: #{tpu_custom_call.1} parent=35 // pred_check
          %p286 = pneg %p68
        $region38: #{tpu_custom_call.1} parent=35 // pred_check_branch
          %288 = sbr.rel (%p286) target = $region40
        $region39: #{tpu_custom_call.1} parent=35 // pred_region
          %s289 = sand.u32 %s53, 1
          %s290 = scalar_lea.sflag [#allocation4], %s289
          %s291 = sand.u32 %s53, 1
          %s292 = smul.addr %s291, 104
          %s293 = scalar_lea.vmem [#allocation5], %s292
          %294 = dma.done %s290, 1664
        $region40: #{tpu_custom_call.1} parent=35 // pred_fallthru
          _
      $region36: #{tpu_custom_call.1} parent=5 // pred_fallthru
        _
    $region6: #{tpu_custom_call.1} parent=1 // loop_footer
      %s17 = sadd.s32 1, %s13
    $region7: #{tpu_custom_call.1} parent=1 // loop_footer_branch
      %12 = sbr.rel target = $region3
    $region8: #{tpu_custom_call.1} parent=1 // loop_exit
      _
    %295 = vsyncpa [#allocation3], 1
    %s296 = scalar_lea.sflag [#allocation3], 1
    %297 = vsyncpa %s296, 1
    %298 = vsyncpa [#allocation4], 1
    %s299 = scalar_lea.sflag [#allocation4], 1
    %300 = vsyncpa %s299, 1

</llo_original>
